<compile_context>
chip_gen: v5e
topology: v5e:2x2
jax: 0.10.0
libtpu: 0.0.40
codegen_flags: <defaults>
</compile_context>

<pallas_src>
import functools
import numpy as np
import jax
import jax.numpy as jnp
from jax.experimental import pallas as pl
from jax.experimental.pallas import tpu as pltpu


# ----------------------------------------------------------------------------
# Synthetic e3nn pieces: so3 generators / create_gen (deterministic, in-script)
# ----------------------------------------------------------------------------
def so3_generators(l):
    """Real antisymmetric SO(3) generators for degree-l irrep (l in {0, 1})."""
    if l == 0:
        return np.zeros((3, 1, 1), dtype=np.float64)
    if l == 1:
        X = np.array([[0, 0, 0], [0, 0, -1], [0, 1, 0]], dtype=np.float64)
        Y = np.array([[0, 0, 1], [0, 0, 0], [-1, 0, 0]], dtype=np.float64)
        Z = np.array([[0, -1, 0], [1, 0, 0], [0, 0, 0]], dtype=np.float64)
        return np.stack([X, Y, Z])
    # TODO(synk): general-l real generators (Wigner change of basis) not needed here.
    raise NotImplementedError("only l <= 1 supported in this synthetic script")


def block_diag(mats):
    n = sum(m.shape[0] for m in mats)
    out = np.zeros((n, n), dtype=np.float64)
    r = 0
    for m in mats:
        k = m.shape[0]
        out[r:r + k, r:r + k] = m
        r += k
    return out


def create_gen(irreps):
    """irreps: list of lists of (mul, l). Returns (D, 3*D) = cat([X;Y;Z], 0).T."""
    gx, gy, gz = [], [], []
    for irrep in irreps:
        for mul, l in irrep:
            g = so3_generators(l)
            for _ in range(mul):
                gx.append(g[0]); gy.append(g[1]); gz.append(g[2])
    X, Y, Z = block_diag(gx), block_diag(gy), block_diag(gz)
    return np.concatenate([X, Y, Z], axis=0).T  # (D, 3D)


def irreps_dim(irrep):
    return sum(mul * (2 * l + 1) for mul, l in irrep)


# ----------------------------------------------------------------------------
# Weight-only glue (hoist: depends on W / generators, not on x or N)
# ----------------------------------------------------------------------------
def lie_bracket_gram(W, gen_in, gen_out):
    """G = Mdiff @ Mdiff^T with Mdiff[:, g*D_out:(g+1)*D_out] = genIn_g @ W - W @ genOut_g.

    ||x @ Mdiff||_F^2 == sum((x @ G) * x), so the kernel only needs the small
    (D_in, D_in) Gram matrix.  Computed at HIGHEST precision, once per weight
    update (call this outside the per-step forward, or let jit CSE it).
    """
    hi = jax.lax.Precision.HIGHEST
    blocks = []
    for g in range(3):
        gin_g = gen_in[:, g::3]    # (D_in, D_in)
        gout_g = gen_out[:, g::3]  # (D_out, D_out)
        blocks.append(jnp.matmul(gin_g, W, precision=hi)
                      - jnp.matmul(W, gout_g, precision=hi))
    mdiff = jnp.concatenate(blocks, axis=1)          # (D_in, 3*D_out)
    return jnp.matmul(mdiff, mdiff.T, precision=hi)  # (D_in, D_in)


# ----------------------------------------------------------------------------
# Pallas kernel: two MXU matmuls + per-tile squared-norm partials
# ----------------------------------------------------------------------------
def _linear_appr_kernel(x_ref, w_ref, g_ref, wx_ref, npart_ref, ldpart_ref, *,
                        mix_coef):
    x = x_ref[...]                         # (tn, D_in) compute dtype
    xf = x.astype(jnp.float32)             # keep VPU/reduction math in f32 (v5e: no bf16 VPU)

    # MXU matmuls with f32 accumulation.
    wx = jnp.dot(x, w_ref[...], preferred_element_type=jnp.float32)   # (tn, D_out)
    xg = jnp.dot(x, g_ref[...], preferred_element_type=jnp.float32)   # (tn, D_in)

    # Output tile. D_out=64 < 128 lanes -> masked stores; out_dtype=bf16 halves
    # vst traffic (matters most on v5e's single store slot).
    wx_ref[...] = (mix_coef * wx).astype(wx_ref.dtype)

    # Per-tile partial sums, written to this tile's own partial block:
    # race-free across the grid, so the axis can be "parallel" (v7x megacore).
    n_part = jnp.sum(wx * wx, keepdims=True)       # (1, 1) = ||x W||_F^2 of tile
    ld_part = jnp.sum(xg * xf, keepdims=True)      # (1, 1) = ||x Mdiff||_F^2 of tile
    npart_ref[...] = jnp.broadcast_to(n_part, npart_ref.shape)
    ldpart_ref[...] = jnp.broadcast_to(ld_part, ldpart_ref.shape)


@functools.partial(jax.jit,
                   static_argnames=("mix_coef", "tn", "compute_dtype", "out_dtype"))
def _linear_appr_pallas(x, W, G, *, mix_coef=1.0, tn=256,
                        compute_dtype=jnp.float32, out_dtype=jnp.float32):
    """x: (N, D_in); W: (D_in, D_out) = torch weight^T; G: (D_in, D_in) Gram."""
    N, D_in = x.shape
    D_out = W.shape[1]
    assert tn % 8 == 0, "node tile must be a multiple of 8 sublanes"

    # Pad N to a tile multiple; zero rows contribute nothing to either norm.
    n_pad = (-N) % tn
    xp = jnp.pad(x, ((0, n_pad), (0, 0))) if n_pad else x
    Np = N + n_pad
    num_tiles = Np // tn

    xc = xp.astype(compute_dtype)
    Wc = W.astype(compute_dtype)
    Gc = G.astype(compute_dtype)

    out_shapes = (
        jax.ShapeDtypeStruct((Np, D_out), out_dtype),
        jax.ShapeDtypeStruct((num_tiles, 8, 128), jnp.float32),   # n partials
        jax.ShapeDtypeStruct((num_tiles, 8, 128), jnp.float32),   # ld_n partials
    )
    wx, n_part, ld_part = pl.pallas_call(
        functools.partial(_linear_appr_kernel, mix_coef=mix_coef),
        out_shape=out_shapes,
        grid=(num_tiles,),
        in_specs=[
            pl.BlockSpec((tn, D_in), lambda i: (i, 0)),
            pl.BlockSpec((D_in, D_out), lambda i: (0, 0)),
            pl.BlockSpec((D_in, D_in), lambda i: (0, 0)),
        ],
        out_specs=(
            pl.BlockSpec((tn, D_out), lambda i: (i, 0)),
            pl.BlockSpec((1, 8, 128), lambda i: (i, 0, 0)),
            pl.BlockSpec((1, 8, 128), lambda i: (i, 0, 0)),
        ),
        compiler_params=pltpu.CompilerParams(
            dimension_semantics=("parallel",)),
    )(xc, Wc, Gc)

    n = jnp.sum(n_part[:, 0, 0])
    ld_n = jnp.sum(ld_part[:, 0, 0])
    return wx[:N], ld_n, n


def linear_appr_forward(x, W, gen_in, gen_out, *, equiv=True, mix_coef=1.0,
                        tn=256, compute_dtype=jnp.float32,
                        out_dtype=jnp.float32, gram=None):
    """Module-mirroring entry point. `equiv=True` returns Python (0, 0, 0),
    matching the PyTorch source."""
    if equiv:
        return (0, 0, 0)
    G = lie_bracket_gram(W, gen_in, gen_out) if gram is None else gram
    return _linear_appr_pallas(x, W, G, mix_coef=mix_coef, tn=tn,
                               compute_dtype=compute_dtype, out_dtype=out_dtype)


# ----------------------------------------------------------------------------
# Plain-JAX reference (direct transcription of the PyTorch forward)
# ----------------------------------------------------------------------------
def reference_forward(x, W, gen_in, gen_out, mix_coef=1.0):
    hi = jax.lax.Precision.HIGHEST
    mm = lambda a, b: jnp.matmul(a, b, precision=hi)
    wx = mm(x, W)
    Wx = mm(x, W)
    AWx = mm(Wx, gen_out).reshape(*Wx.shape[:-1], -1, 3).swapaxes(-1, -2)
    WAx = mm(mm(x, gen_in).reshape(*x.shape[:-1], -1, 3).swapaxes(-1, -2), W)
    n = jnp.sum(Wx * Wx)
    ld_n = jnp.sum((WAx - AWx) ** 2)
    return mix_coef * wx, ld_n, n


# ----------------------------------------------------------------------------
if __name__ == "__main__":
    # in_irrep "8x0e + 8x1o" -> dim 32 ; out_irrep "16x0e + 16x1o" -> dim 64
    in_irrep = [(8, 0), (8, 1)]
    out_irrep = [(16, 0), (16, 1)]
    D_in, D_out = irreps_dim(in_irrep), irreps_dim(out_irrep)
    N = 640  # deliberately NOT a multiple of tn: exercises padding + multi-tile partials

    gen_in = jnp.asarray(create_gen([in_irrep]), jnp.float32)    # (32, 96)
    gen_out = jnp.asarray(create_gen([out_irrep]), jnp.float32)  # (64, 192)

    key = jax.random.PRNGKey(0)
    kx, kw = jax.random.split(key)
    x = jax.random.normal(kx, (N, D_in), dtype=jnp.float32)
    # torch.nn.init.normal_(lin.weight, mean=0, std=1e-4); torch weight is (out, in)
    W_torch = 1e-4 * jax.random.normal(kw, (D_out, D_in), dtype=jnp.float32)
    W = W_torch.T  # (D_in, D_out)

    # Default module path (equiv=True) returns (0, 0, 0)
    assert linear_appr_forward(x, W, gen_in, gen_out, equiv=True) == (0, 0, 0)

    # Weight-only glue, hoisted out of the per-forward hot path.
    G = lie_bracket_gram(W, gen_in, gen_out)

    wx_r, ld_r, n_r = reference_forward(x, W, gen_in, gen_out)

    # f32 kernel path
    wx, ld_n, n = jax.block_until_ready(
        linear_appr_forward(x, W, gen_in, gen_out, equiv=False, gram=G,
                            tn=256, compute_dtype=jnp.float32,
                            out_dtype=jnp.float32))
    assert wx.shape == (N, D_out) and wx.dtype == jnp.float32
    assert jnp.allclose(wx, wx_r, rtol=1e-2, atol=1e-8), "wx mismatch (f32)"
    assert jnp.allclose(n, n_r, rtol=2e-2), "n mismatch (f32)"
    assert jnp.allclose(ld_n, ld_r, rtol=2e-2), "ld_n mismatch (f32)"

    # bf16 compute/store path (memory-bound kernel: halves HBM read of x and write of wx)
    wx_b, ld_b, n_b = jax.block_until_ready(
        linear_appr_forward(x, W, gen_in, gen_out, equiv=False, gram=G,
                            tn=256, compute_dtype=jnp.bfloat16,
                            out_dtype=jnp.bfloat16))
    assert wx_b.dtype == jnp.bfloat16
    assert jnp.allclose(wx_b.astype(jnp.float32), wx_r, rtol=5e-2, atol=3e-5), "wx mismatch (bf16)"
    assert jnp.allclose(n_b, n_r, rtol=1e-1), "n mismatch (bf16)"
    assert jnp.allclose(ld_b, ld_r, rtol=1e-1), "ld_n mismatch (bf16)"

    print("KERNEL_OK")
</pallas_src>

<mosaic_0001>
module attributes {stable_mosaic.version = 11 : i64} {
  func.func @_linear_appr_kernel(%arg0: i32, %arg1: memref<256x32xf32, #tpu.memory_space<vmem>>, %arg2: memref<32x64xf32, #tpu.memory_space<vmem>>, %arg3: memref<32x32xf32, #tpu.memory_space<vmem>>, %arg4: memref<256x64xf32, #tpu.memory_space<vmem>>, %arg5: memref<1x8x128xf32, #tpu.memory_space<vmem>>, %arg6: memref<1x8x128xf32, #tpu.memory_space<vmem>>) attributes {dimension_semantics = [#tpu.dimension_semantics<parallel>], iteration_bounds = array<i64: 3>, scalar_prefetch = 0 : i64, scratch_operands = 0 : i64, tpu.core_type = #tpu.core_type<tc>, window_params = [{transform_indices = @transform_0, window_bounds = array<i64: 256, 32>}, {pipeline_mode = #tpu.pipeline_mode<synchronous>, transform_indices = @transform_1, window_bounds = array<i64: 32, 64>}, {pipeline_mode = #tpu.pipeline_mode<synchronous>, transform_indices = @transform_2, window_bounds = array<i64: 32, 32>}, {transform_indices = @transform_3, window_bounds = array<i64: 256, 64>}, {transform_indices = @transform_4, window_bounds = array<i64: 1, 8, 128>}, {transform_indices = @transform_5, window_bounds = array<i64: 1, 8, 128>}]} {
    %c0 = arith.constant 0 : index
    %c0_0 = arith.constant 0 : index
    %0 = vector.load %arg1[%c0, %c0_0] : memref<256x32xf32, #tpu.memory_space<vmem>>, vector<256x32xf32>
    %c0_1 = arith.constant 0 : index
    %c0_2 = arith.constant 0 : index
    %1 = vector.load %arg2[%c0_1, %c0_2] : memref<32x64xf32, #tpu.memory_space<vmem>>, vector<32x64xf32>
    %cst = arith.constant dense<0.000000e+00> : vector<256x64xf32>
    %2 = tpu.matmul %0, %1, %cst {dimension_numbers = #tpu.dot_dimension_numbers<[1], [0], [0], [1], [0, 0, 1, 1], [], []>} : vector<256x32xf32>, vector<32x64xf32>, vector<256x64xf32> -> vector<256x64xf32>
    %c0_3 = arith.constant 0 : index
    %c0_4 = arith.constant 0 : index
    %3 = vector.load %arg3[%c0_3, %c0_4] : memref<32x32xf32, #tpu.memory_space<vmem>>, vector<32x32xf32>
    %cst_5 = arith.constant dense<0.000000e+00> : vector<256x32xf32>
    %4 = tpu.matmul %0, %3, %cst_5 {dimension_numbers = #tpu.dot_dimension_numbers<[1], [0], [0], [1], [0, 0, 1, 1], [], []>} : vector<256x32xf32>, vector<32x32xf32>, vector<256x32xf32> -> vector<256x32xf32>
    %cst_6 = arith.constant 1.000000e+00 : f32
    %5 = vector.broadcast %cst_6 : f32 to vector<256x64xf32>
    %6 = arith.mulf %5, %2 : vector<256x64xf32>
    %c0_7 = arith.constant 0 : index
    %c0_8 = arith.constant 0 : index
    %7 = vector.load %arg4[%c0_7, %c0_8] : memref<256x64xf32, #tpu.memory_space<vmem>>, vector<256x64xf32>
    tpu.vector_store %arg4[%c0_7, %c0_8], %6 {strides = array<i32>} : memref<256x64xf32, #tpu.memory_space<vmem>>, vector<256x64xf32>,
    %8 = arith.mulf %2, %2 : vector<256x64xf32>
    %9 = vector.shape_cast %8 : vector<256x64xf32> to vector<1x256x64xf32>
    %cst_9 = arith.constant dense<0.000000e+00> : vector<1xf32>
    %10 = vector.multi_reduction <add>, %9, %cst_9 [1, 2] : vector<1x256x64xf32> to vector<1xf32>
    %11 = vector.shape_cast %10 : vector<1xf32> to vector<1x1x1xf32>
    %12 = vector.extract %11[0, 0, 0] : f32 from vector<1x1x1xf32>
    %13 = vector.broadcast %12 : f32 to vector<1x1xf32>
    %14 = arith.mulf %4, %0 : vector<256x32xf32>
    %15 = vector.shape_cast %14 : vector<256x32xf32> to vector<1x256x32xf32>
    %cst_10 = arith.constant dense<0.000000e+00> : vector<1xf32>
    %16 = vector.multi_reduction <add>, %15, %cst_10 [1, 2] : vector<1x256x32xf32> to vector<1xf32>
    %17 = vector.shape_cast %16 : vector<1xf32> to vector<1x1x1xf32>
    %18 = vector.extract %17[0, 0, 0] : f32 from vector<1x1x1xf32>
    %19 = vector.broadcast %18 : f32 to vector<1x1xf32>
    %20 = vector.shape_cast %13 : vector<1x1xf32> to vector<1x1x1xf32>
    %21 = vector.broadcast %20 : vector<1x1x1xf32> to vector<1x8x128xf32>
    %c0_11 = arith.constant 0 : index
    %c0_12 = arith.constant 0 : index
    %c0_13 = arith.constant 0 : index
    %22 = vector.load %arg5[%c0_11, %c0_12, %c0_13] : memref<1x8x128xf32, #tpu.memory_space<vmem>>, vector<1x8x128xf32>
    tpu.vector_store %arg5[%c0_11, %c0_12, %c0_13], %21 {strides = array<i32>} : memref<1x8x128xf32, #tpu.memory_space<vmem>>, vector<1x8x128xf32>,
    %23 = vector.shape_cast %19 : vector<1x1xf32> to vector<1x1x1xf32>
    %24 = vector.broadcast %23 : vector<1x1x1xf32> to vector<1x8x128xf32>
    %c0_14 = arith.constant 0 : index
    %c0_15 = arith.constant 0 : index
    %c0_16 = arith.constant 0 : index
    %25 = vector.load %arg6[%c0_14, %c0_15, %c0_16] : memref<1x8x128xf32, #tpu.memory_space<vmem>>, vector<1x8x128xf32>
    tpu.vector_store %arg6[%c0_14, %c0_15, %c0_16], %24 {strides = array<i32>} : memref<1x8x128xf32, #tpu.memory_space<vmem>>, vector<1x8x128xf32>,
    return
  }
  func.func @transform_0(%arg0: i32) -> (i32, i32) {
    %c0_i32 = arith.constant 0 : i32
    %c0_i32_0 = arith.constant 0 : i32
    return %arg0, %c0_i32 : i32, i32
  }
  func.func @transform_1(%arg0: i32) -> (i32, i32) {
    %c0_i32 = arith.constant 0 : i32
    %c0_i32_0 = arith.constant 0 : i32
    %c0_i32_1 = arith.constant 0 : i32
    return %c0_i32, %c0_i32_0 : i32, i32
  }
  func.func @transform_2(%arg0: i32) -> (i32, i32) {
    %c0_i32 = arith.constant 0 : i32
    %c0_i32_0 = arith.constant 0 : i32
    %c0_i32_1 = arith.constant 0 : i32
    return %c0_i32, %c0_i32_0 : i32, i32
  }
  func.func @transform_3(%arg0: i32) -> (i32, i32) {
    %c0_i32 = arith.constant 0 : i32
    %c0_i32_0 = arith.constant 0 : i32
    return %arg0, %c0_i32 : i32, i32
  }
  func.func @transform_4(%arg0: i32) -> (i32, i32, i32) {
    %c0_i32 = arith.constant 0 : i32
    %c0_i32_0 = arith.constant 0 : i32
    %c0_i32_1 = arith.constant 0 : i32
    return %arg0, %c0_i32, %c0_i32_0 : i32, i32, i32
  }
  func.func @transform_5(%arg0: i32) -> (i32, i32, i32) {
    %c0_i32 = arith.constant 0 : i32
    %c0_i32_0 = arith.constant 0 : i32
    %c0_i32_1 = arith.constant 0 : i32
    return %arg0, %c0_i32, %c0_i32_0 : i32, i32, i32
  }
}

</mosaic_0001>

<llo_original>
// kernel: _linear_appr_pallas.1
$region0: #{_linear_appr_pallas.1}
  #allocation0 [shape = 'u32[]', space=smem, size = 0x4, offset = 0x4, fixed_abs, tag = 'smem constant byte address 0x4 - core index']
  #allocation1 [shape = 'u32[72,128]{1,0:T(1,128)}', space=vmem, size = 0x9000, scoped, tag = 'internal scratch']
  %s0 = inlined_call_operand.vmem [shape: f32[768,32], index: 0, kind: input, shape index: {}]
  %s1 = inlined_call_operand.vmem [shape: f32[32,64], index: 1, kind: input, shape index: {}]
  %s2 = inlined_call_operand.vmem [shape: f32[32,32], index: 2, kind: input, shape index: {}]
  %s3 = inlined_call_operand.vmem [shape: f32[768,64], index: 3, kind: output, shape index: {0}]
  %s4 = inlined_call_operand.vmem [shape: f32[3,8,128], index: 4, kind: output, shape index: {1}]
  %s5 = inlined_call_operand.vmem [shape: f32[3,8,128], index: 5, kind: output, shape index: {2}]
  %6 = xla_tuple %s3, %s4, %s5
  %s7 = sld [smem:[#allocation0]]
  $region61: #{_linear_appr_pallas.1} parent=0
    _
  %s9 = ssub.s32 1, %s7
  %s10 = scalar_select 0, %s9, %s7
  loop: start=0, step=1, limit=5
  $region2: #{_linear_appr_pallas.1} parent=0 // loop_pre_header
    _
  $region3: #{_linear_appr_pallas.1} parent=0 // loop_header
    %s12 = sphi 0, %s16
    %p13 = scmp.ge.s32.totalorder %s12, 5
    %s22 = sphi 0, %s24
    %s25 = sphi 0, %s22
    %s26 = sphi 0, %s25
    %s42 = sphi 0, %s26
    %s46 = sphi 0, %s46
    %s48 = sphi 0, %s46
    %s49 = sphi 0, %s48
    %s63 = sphi 0, %s49
    %s67 = sphi 0, %s67
    %s69 = sphi 0, %s67
    %s70 = sphi 0, %s69
    %s84 = sphi 0, %s70
    %s90 = sphi 0, %s92
    %s93 = sphi 0, %s90
    %s94 = sphi 0, %s93
    %s110 = sphi 0, %s94
    %s116 = sphi 0, %s118
    %s119 = sphi 0, %s116
    %s120 = sphi 0, %s119
    %s136 = sphi 0, %s120
    %s142 = sphi 0, %s144
    %s145 = sphi 0, %s142
    %s146 = sphi 0, %s145
    %s162 = sphi 0, %s146
  $region4: #{_linear_appr_pallas.1} parent=0 // loop_header_branch
    %15 = sbr.rel (%p13) target = $region8
  $region5: #{_linear_appr_pallas.1} parent=0 // loop_body
    %s17 = ssub.s32 %s12, 1
    %s18 = ssub.s32 %s12, 2
    %s19 = sadd.s32 %s12, 1
    %s20 = ssub.s32 %s12, %s19
    %p21 = scmp.eq.s32.totalorder %s20, 0
    %s23 = sadd.s32 %s22, 1
    %s24 = scalar_select %p21, %s22, %s23
    %p27 = pneg %p21
    %p28 = scmp.eq.s32.totalorder %s12, 2
    %p29 = por %p27, %p28
    %p30 = scmp.ne.s32.totalorder %s22, %s25
    %p31 = scmp.eq.s32.totalorder %s12, 0
    %p32 = por %p30, %p31
    %p33 = scmp.ne.s32.totalorder %s22, %s25
    %p34 = scmp.eq.s32.totalorder %s17, 2
    %p35 = por %p33, %p34
    %p36 = scmp.ne.s32.totalorder %s25, %s26
    %p37 = scmp.eq.s32.totalorder %s17, 0
    %p38 = por %p36, %p37
    %p39 = scmp.ne.s32.totalorder %s25, %s26
    %p40 = scmp.eq.s32.totalorder %s18, 2
    %p41 = por %p39, %p40
    %p43 = scmp.ne.s32.totalorder %s26, %s42
    %p44 = scmp.eq.s32.totalorder %s18, 0
    %p45 = por %p43, %p44
    %s47 = sadd.s32 %s46, 1
    %p50 = scmp.eq.s32.totalorder %s12, 2
    %p51 = scmp.ne.s32.totalorder %s46, %s48
    %p52 = scmp.eq.s32.totalorder %s12, 0
    %p53 = por %p51, %p52
    %p54 = scmp.ne.s32.totalorder %s46, %s48
    %p55 = scmp.eq.s32.totalorder %s17, 2
    %p56 = por %p54, %p55
    %p57 = scmp.ne.s32.totalorder %s48, %s49
    %p58 = scmp.eq.s32.totalorder %s17, 0
    %p59 = por %p57, %p58
    %p60 = scmp.ne.s32.totalorder %s48, %s49
    %p61 = scmp.eq.s32.totalorder %s18, 2
    %p62 = por %p60, %p61
    %p64 = scmp.ne.s32.totalorder %s49, %s63
    %p65 = scmp.eq.s32.totalorder %s18, 0
    %p66 = por %p64, %p65
    %s68 = sadd.s32 %s67, 1
    %p71 = scmp.eq.s32.totalorder %s12, 2
    %p72 = scmp.ne.s32.totalorder %s67, %s69
    %p73 = scmp.eq.s32.totalorder %s12, 0
    %p74 = por %p72, %p73
    %p75 = scmp.ne.s32.totalorder %s67, %s69
    %p76 = scmp.eq.s32.totalorder %s17, 2
    %p77 = por %p75, %p76
    %p78 = scmp.ne.s32.totalorder %s69, %s70
    %p79 = scmp.eq.s32.totalorder %s17, 0
    %p80 = por %p78, %p79
    %p81 = scmp.ne.s32.totalorder %s69, %s70
    %p82 = scmp.eq.s32.totalorder %s18, 2
    %p83 = por %p81, %p82
    %p85 = scmp.ne.s32.totalorder %s70, %s84
    %p86 = scmp.eq.s32.totalorder %s18, 0
    %p87 = por %p85, %p86
    %s88 = ssub.s32 %s12, %s19
    %p89 = scmp.eq.s32.totalorder %s88, 0
    %s91 = sadd.s32 %s90, 1
    %s92 = scalar_select %p89, %s90, %s91
    %p95 = pneg %p89
    %p96 = scmp.eq.s32.totalorder %s12, 2
    %p97 = por %p95, %p96
    %p98 = scmp.ne.s32.totalorder %s90, %s93
    %p99 = scmp.eq.s32.totalorder %s12, 0
    %p100 = por %p98, %p99
    %p101 = scmp.ne.s32.totalorder %s90, %s93
    %p102 = scmp.eq.s32.totalorder %s17, 2
    %p103 = por %p101, %p102
    %p104 = scmp.ne.s32.totalorder %s93, %s94
    %p105 = scmp.eq.s32.totalorder %s17, 0
    %p106 = por %p104, %p105
    %p107 = scmp.ne.s32.totalorder %s93, %s94
    %p108 = scmp.eq.s32.totalorder %s18, 2
    %p109 = por %p107, %p108
    %p111 = scmp.ne.s32.totalorder %s94, %s110
    %p112 = scmp.eq.s32.totalorder %s18, 0
    %p113 = por %p111, %p112
    %s114 = ssub.s32 %s12, %s19
    %p115 = scmp.eq.s32.totalorder %s114, 0
    %s117 = sadd.s32 %s116, 1
    %s118 = scalar_select %p115, %s116, %s117
    %p121 = pneg %p115
    %p122 = scmp.eq.s32.totalorder %s12, 2
    %p123 = por %p121, %p122
    %p124 = scmp.ne.s32.totalorder %s116, %s119
    %p125 = scmp.eq.s32.totalorder %s12, 0
    %p126 = por %p124, %p125
    %p127 = scmp.ne.s32.totalorder %s116, %s119
    %p128 = scmp.eq.s32.totalorder %s17, 2
    %p129 = por %p127, %p128
    %p130 = scmp.ne.s32.totalorder %s119, %s120
    %p131 = scmp.eq.s32.totalorder %s17, 0
    %p132 = por %p130, %p131
    %p133 = scmp.ne.s32.totalorder %s119, %s120
    %p134 = scmp.eq.s32.totalorder %s18, 2
    %p135 = por %p133, %p134
    %p137 = scmp.ne.s32.totalorder %s120, %s136
    %p138 = scmp.eq.s32.totalorder %s18, 0
    %p139 = por %p137, %p138
    %s140 = ssub.s32 %s12, %s19
    %p141 = scmp.eq.s32.totalorder %s140, 0
    %s143 = sadd.s32 %s142, 1
    %s144 = scalar_select %p141, %s142, %s143
    %p147 = pneg %p141
    %p148 = scmp.eq.s32.totalorder %s12, 2
    %p149 = por %p147, %p148
    %p150 = scmp.ne.s32.totalorder %s142, %s145
    %p151 = scmp.eq.s32.totalorder %s12, 0
    %p152 = por %p150, %p151
    %p153 = scmp.ne.s32.totalorder %s142, %s145
    %p154 = scmp.eq.s32.totalorder %s17, 2
    %p155 = por %p153, %p154
    %p156 = scmp.ne.s32.totalorder %s145, %s146
    %p157 = scmp.eq.s32.totalorder %s17, 0
    %p158 = por %p156, %p157
    %p159 = scmp.ne.s32.totalorder %s145, %s146
    %p160 = scmp.eq.s32.totalorder %s18, 2
    %p161 = por %p159, %p160
    %p163 = scmp.ne.s32.totalorder %s146, %s162
    %p164 = scmp.eq.s32.totalorder %s18, 0
    %p165 = por %p163, %p164
    %p166 = scmp.le.s32.totalorder 1, %s12
    %p167 = scmp.lt.s32.totalorder %s12, 4
    %p168 = pnand %p166, %p167
    %p169 = pneg %p168
    // Predicated region
    $region9: #{_linear_appr_pallas.1} parent=5 // pred_check
      _
    $region10: #{_linear_appr_pallas.1} parent=5 // pred_check_branch
      %171 = sbr.rel (%p168) target = $region12
    $region11: #{_linear_appr_pallas.1} parent=5 // pred_region
      %s172 = ssub.s32 %s12, 1
      // Predicated region
      $region13: #{_linear_appr_pallas.1} parent=11 // pred_check
        %p173 = pneg %p59
      $region14: #{_linear_appr_pallas.1} parent=11 // pred_check_branch
        %175 = sbr.rel (%p173) target = $region16
      $region15: #{_linear_appr_pallas.1} parent=11 // pred_region
        _
      $region16: #{_linear_appr_pallas.1} parent=11 // pred_fallthru
        _
      // Predicated region
      $region17: #{_linear_appr_pallas.1} parent=11 // pred_check
        %p176 = pneg %p80
      $region18: #{_linear_appr_pallas.1} parent=11 // pred_check_branch
        %178 = sbr.rel (%p176) target = $region20
      $region19: #{_linear_appr_pallas.1} parent=11 // pred_region
        _
      $region20: #{_linear_appr_pallas.1} parent=11 // pred_fallthru
        _
    $region12: #{_linear_appr_pallas.1} parent=5 // pred_fallthru
      _
    %p179 = scmp.lt.s32.totalorder %s12, 3
    // Predicated region
    $region21: #{_linear_appr_pallas.1} parent=5 // pred_check
      %p180 = pneg %p179
    $region22: #{_linear_appr_pallas.1} parent=5 // pred_check_branch
      %182 = sbr.rel (%p180) target = $region24
    $region23: #{_linear_appr_pallas.1} parent=5 // pred_region
      // Predicated region
      $region25: #{_linear_appr_pallas.1} parent=23 // pred_check
        %p183 = pneg %p32
      $region26: #{_linear_appr_pallas.1} parent=23 // pred_check_branch
        %185 = sbr.rel (%p183) target = $region28
      $region27: #{_linear_appr_pallas.1} parent=23 // pred_region
        %s186 = smul.u32 32, %s12
        %p187 = scmp.lt.s32.totalorder %s186, 95
        %s188 = scalar_select %p187, %s186, 95
        %s189 = smul.addr %s188, 8
        %s190 = scalar_lea.vmem %s0, %s189
        %s191 = smul.u32 32, %s12
      $region28: #{_linear_appr_pallas.1} parent=23 // pred_fallthru
        _
    $region24: #{_linear_appr_pallas.1} parent=5 // pred_fallthru
      _
    %p192 = scmp.le.s32.totalorder 1, %s12
    %p193 = scmp.lt.s32.totalorder %s12, 4
    %p194 = pnand %p192, %p193
    %p195 = pneg %p194
    // Predicated region
    $region29: #{_linear_appr_pallas.1} parent=5 // pred_check
      _
    $region30: #{_linear_appr_pallas.1} parent=5 // pred_check_branch
      %197 = sbr.rel (%p194) target = $region32
    $region31: #{_linear_appr_pallas.1} parent=5 // pred_region
      %s198 = ssub.s32 %s12, 1
      %s199 = smul.u32 32, %s17
      %p200 = scmp.lt.s32.totalorder %s199, 95
      %s201 = scalar_select %p200, %s199, 95
      %s202 = smul.addr %s201, 8
      %s203 = scalar_lea.vmem %s0, %s202
      %p204 = pneg %p38
      %p205 = pneg %p35
      %p206 = pneg %p59
      %p207 = pneg %p56
      %p208 = pneg %p80
      %p209 = pneg %p77
      %p210 = pneg %p106
      %p211 = pneg %p103
      %s212 = smul.u32 32, %s17
      %p213 = scmp.lt.s32.totalorder %s212, 95
      %s214 = scalar_select %p213, %s212, 95
      %s215 = smul.addr %s214, 8
      %s216 = scalar_lea.vmem %s3, %s215
      %p217 = pneg %p132
      %p218 = pneg %p129
      %p219 = scmp.lt.s32.totalorder %s17, 2
      %s220 = scalar_select %p219, %s17, 2
      %s221 = smul.addr %s220, 8
      %s222 = scalar_lea.vmem %s4, %s221
      %p223 = pneg %p158
      %p224 = pneg %p155
      %p225 = scmp.lt.s32.totalorder %s17, 2
      %s226 = scalar_select %p225, %s17, 2
      %s227 = smul.addr %s226, 8
      %s228 = scalar_lea.vmem %s5, %s227
      %s229 = smul.u32 32, %s17
      %p230 = scmp.lt.s32.totalorder %s229, 95
      %s231 = scalar_select %p230, %s229, 95
      %s232 = smul.addr %s231, 8
      %s233 = scalar_lea.vmem %s0, %s232
      %s234 = smul.u32 32, %s17
      %s235 = smul.u32 32, %s17
      %p236 = scmp.lt.s32.totalorder %s235, 95
      %s237 = scalar_select %p236, %s235, 95
      %s238 = smul.addr %s237, 8
      %s239 = scalar_lea.vmem %s3, %s238
      %s240 = smul.u32 32, %s17
      %p241 = scmp.lt.s32.totalorder %s17, 2
      %s242 = scalar_select %p241, %s17, 2
      %s243 = smul.addr %s242, 8
      %s244 = scalar_lea.vmem %s4, %s243
      %p245 = scmp.lt.s32.totalorder %s17, 2
      %s246 = scalar_select %p245, %s17, 2
      %s247 = smul.addr %s246, 8
      %s248 = scalar_lea.vmem %s5, %s247
      %v249 = vld [vmem:[%s233] sm:$0xff]
      %v250 = vld [vmem:[%s233 + $0x8] sm:$0xff]
      %v251 = vld [vmem:[%s233 + $0x10] sm:$0xff]
      %v252 = vld [vmem:[%s233 + $0x18] sm:$0xff]
      %v253 = vld [vmem:[%s233 + $0x20] sm:$0xff]
      %v254 = vld [vmem:[%s233 + $0x28] sm:$0xff]
      %v255 = vld [vmem:[%s233 + $0x30] sm:$0xff]
      %v256 = vld [vmem:[%s233 + $0x38] sm:$0xff]
      %v257 = vld [vmem:[%s233 + $0x40] sm:$0xff]
      %v258 = vld [vmem:[%s233 + $0x48] sm:$0xff]
      %v259 = vld [vmem:[%s233 + $0x50] sm:$0xff]
      %v260 = vld [vmem:[%s233 + $0x58] sm:$0xff]
      %v261 = vld [vmem:[%s233 + $0x60] sm:$0xff]
      %v262 = vld [vmem:[%s233 + $0x68] sm:$0xff]
      %v263 = vld [vmem:[%s233 + $0x70] sm:$0xff]
      %v264 = vld [vmem:[%s233 + $0x78] sm:$0xff]
      %v265 = vld [vmem:[%s233 + $0x80] sm:$0xff]
      %v266 = vld [vmem:[%s233 + $0x88] sm:$0xff]
      %v267 = vld [vmem:[%s233 + $0x90] sm:$0xff]
      %v268 = vld [vmem:[%s233 + $0x98] sm:$0xff]
      %v269 = vld [vmem:[%s233 + $0xa0] sm:$0xff]
      %v270 = vld [vmem:[%s233 + $0xa8] sm:$0xff]
      %v271 = vld [vmem:[%s233 + $0xb0] sm:$0xff]
      %v272 = vld [vmem:[%s233 + $0xb8] sm:$0xff]
      %v273 = vld [vmem:[%s233 + $0xc0] sm:$0xff]
      %v274 = vld [vmem:[%s233 + $0xc8] sm:$0xff]
      %v275 = vld [vmem:[%s233 + $0xd0] sm:$0xff]
      %v276 = vld [vmem:[%s233 + $0xd8] sm:$0xff]
      %v277 = vld [vmem:[%s233 + $0xe0] sm:$0xff]
      %v278 = vld [vmem:[%s233 + $0xe8] sm:$0xff]
      %v279 = vld [vmem:[%s233 + $0xf0] sm:$0xff]
      %v280 = vld [vmem:[%s233 + $0xf8] sm:$0xff]
      %v281 = vld [vmem:[%s1] sm:$0xff]
      %v282 = vld [vmem:[%s1 + $0x8] sm:$0xff]
      %v283 = vld [vmem:[%s1 + $0x10] sm:$0xff]
      %v284 = vld [vmem:[%s1 + $0x18] sm:$0xff]
      %vm285 = vcmask 261120
      %v287 = vsel %vm285, %v249, 0
      %v290 = vsel %vm285, %v250, 0
      %v293 = vsel %vm285, %v251, 0
      %v296 = vsel %vm285, %v252, 0
      %v299 = vsel %vm285, %v253, 0
      %v302 = vsel %vm285, %v254, 0
      %v305 = vsel %vm285, %v255, 0
      %v308 = vsel %vm285, %v256, 0
      %v311 = vsel %vm285, %v257, 0
      %v314 = vsel %vm285, %v258, 0
      %v317 = vsel %vm285, %v259, 0
      %v320 = vsel %vm285, %v260, 0
      %v323 = vsel %vm285, %v261, 0
      %v326 = vsel %vm285, %v262, 0
      %v329 = vsel %vm285, %v263, 0
      %v332 = vsel %vm285, %v264, 0
      %v335 = vsel %vm285, %v265, 0
      %v338 = vsel %vm285, %v266, 0
      %v341 = vsel %vm285, %v267, 0
      %v344 = vsel %vm285, %v268, 0
      %v347 = vsel %vm285, %v269, 0
      %v350 = vsel %vm285, %v270, 0
      %v353 = vsel %vm285, %v271, 0
      %v356 = vsel %vm285, %v272, 0
      %v359 = vsel %vm285, %v273, 0
      %v362 = vsel %vm285, %v274, 0
      %v365 = vsel %vm285, %v275, 0
      %v368 = vsel %vm285, %v276, 0
      %v371 = vsel %vm285, %v277, 0
      %v374 = vsel %vm285, %v278, 0
      %v377 = vsel %vm285, %v279, 0
      %v380 = vsel %vm285, %v280, 0
      %382 = vmatpush.msra.mxu0 0.0
      %383 = vmatpush.msra.mxu0 0.0
      %384 = vmatpush.msra.mxu0 0.0
      %385 = vmatpush.msra.mxu0 0.0
      %386 = vmatpush.msra.mxu0 0.0
      %387 = vmatpush.msra.mxu0 0.0
      %388 = vmatpush.msra.mxu0 0.0
      %389 = vmatpush.msra.mxu0 0.0
      %390 = vmatpush.msra.mxu0 0.0
      %391 = vmatpush.msra.mxu0 0.0
      %392 = vmatpush.msra.mxu0 0.0
      %393 = vmatpush.msra.mxu0 0.0
      %394 = vmatpush.msra.mxu0 %v284
      %395 = vmatpush.msra.mxu0 %v283
      %396 = vmatpush.msra.mxu0 %v282
      %397 = vmatpush.msra.mxu0 %v281
      %398 = vmatmul.f32.gmra.mxu0 %v287
      %v399 = vpop.f32.mrf.mxu0
      %v400 = vadd.f32 0.0, %v399
      %401 = vmatmul.f32.gmra.mxu0 %v290
      %v402 = vpop.f32.mrf.mxu0
      %v403 = vadd.f32 0.0, %v402
      %404 = vmatmul.f32.gmra.mxu0 %v293
      %v405 = vpop.f32.mrf.mxu0
      %v406 = vadd.f32 0.0, %v405
      %407 = vmatmul.f32.gmra.mxu0 %v296
      %v408 = vpop.f32.mrf.mxu0
      %v409 = vadd.f32 0.0, %v408
      %410 = vmatmul.f32.gmra.mxu0 %v299
      %v411 = vpop.f32.mrf.mxu0
      %v412 = vadd.f32 0.0, %v411
      %413 = vmatmul.f32.gmra.mxu0 %v302
      %v414 = vpop.f32.mrf.mxu0
      %v415 = vadd.f32 0.0, %v414
      %416 = vmatmul.f32.gmra.mxu0 %v305
      %v417 = vpop.f32.mrf.mxu0
      %v418 = vadd.f32 0.0, %v417
      %419 = vmatmul.f32.gmra.mxu0 %v308
      %v420 = vpop.f32.mrf.mxu0
      %v421 = vadd.f32 0.0, %v420
      %422 = vmatmul.f32.gmra.mxu0 %v311
      %v423 = vpop.f32.mrf.mxu0
      %v424 = vadd.f32 0.0, %v423
      %425 = vmatmul.f32.gmra.mxu0 %v314
      %v426 = vpop.f32.mrf.mxu0
      %v427 = vadd.f32 0.0, %v426
      %428 = vmatmul.f32.gmra.mxu0 %v317
      %v429 = vpop.f32.mrf.mxu0
      %v430 = vadd.f32 0.0, %v429
      %431 = vmatmul.f32.gmra.mxu0 %v320
      %v432 = vpop.f32.mrf.mxu0
      %v433 = vadd.f32 0.0, %v432
      %434 = vmatmul.f32.gmra.mxu0 %v323
      %v435 = vpop.f32.mrf.mxu0
      %v436 = vadd.f32 0.0, %v435
      %437 = vmatmul.f32.gmra.mxu0 %v326
      %v438 = vpop.f32.mrf.mxu0
      %v439 = vadd.f32 0.0, %v438
      %440 = vmatmul.f32.gmra.mxu0 %v329
      %v441 = vpop.f32.mrf.mxu0
      %v442 = vadd.f32 0.0, %v441
      %443 = vmatmul.f32.gmra.mxu0 %v332
      %v444 = vpop.f32.mrf.mxu0
      %v445 = vadd.f32 0.0, %v444
      %446 = vmatmul.f32.gmra.mxu0 %v335
      %v447 = vpop.f32.mrf.mxu0
      %v448 = vadd.f32 0.0, %v447
      %449 = vmatmul.f32.gmra.mxu0 %v338
      %v450 = vpop.f32.mrf.mxu0
      %v451 = vadd.f32 0.0, %v450
      %452 = vmatmul.f32.gmra.mxu0 %v341
      %v453 = vpop.f32.mrf.mxu0
      %v454 = vadd.f32 0.0, %v453
      %455 = vmatmul.f32.gmra.mxu0 %v344
      %v456 = vpop.f32.mrf.mxu0
      %v457 = vadd.f32 0.0, %v456
      %458 = vmatmul.f32.gmra.mxu0 %v347
      %v459 = vpop.f32.mrf.mxu0
      %v460 = vadd.f32 0.0, %v459
      %461 = vmatmul.f32.gmra.mxu0 %v350
      %v462 = vpop.f32.mrf.mxu0
      %v463 = vadd.f32 0.0, %v462
      %464 = vmatmul.f32.gmra.mxu0 %v353
      %v465 = vpop.f32.mrf.mxu0
      %v466 = vadd.f32 0.0, %v465
      %467 = vmatmul.f32.gmra.mxu0 %v356
      %v468 = vpop.f32.mrf.mxu0
      %v469 = vadd.f32 0.0, %v468
      %470 = vmatmul.f32.gmra.mxu0 %v359
      %v471 = vpop.f32.mrf.mxu0
      %v472 = vadd.f32 0.0, %v471
      %473 = vmatmul.f32.gmra.mxu0 %v362
      %v474 = vpop.f32.mrf.mxu0
      %v475 = vadd.f32 0.0, %v474
      %476 = vmatmul.f32.gmra.mxu0 %v365
      %v477 = vpop.f32.mrf.mxu0
      %v478 = vadd.f32 0.0, %v477
      %479 = vmatmul.f32.gmra.mxu0 %v368
      %v480 = vpop.f32.mrf.mxu0
      %v481 = vadd.f32 0.0, %v480
      %482 = vmatmul.f32.gmra.mxu0 %v371
      %v483 = vpop.f32.mrf.mxu0
      %v484 = vadd.f32 0.0, %v483
      %485 = vmatmul.f32.gmra.mxu0 %v374
      %v486 = vpop.f32.mrf.mxu0
      %v487 = vadd.f32 0.0, %v486
      %488 = vmatmul.f32.gmra.mxu0 %v377
      %v489 = vpop.f32.mrf.mxu0
      %v490 = vadd.f32 0.0, %v489
      %491 = vmatmul.f32.gmra.mxu0 %v380
      %v492 = vpop.f32.mrf.mxu0
      %v493 = vadd.f32 0.0, %v492
      %494 = vdwg.mxu0
      %v495 = vld [vmem:[%s2] sm:$0xff]
      %v496 = vld [vmem:[%s2 + $0x8] sm:$0xff]
      %v497 = vld [vmem:[%s2 + $0x10] sm:$0xff]
      %v498 = vld [vmem:[%s2 + $0x18] sm:$0xff]
      %499 = vmatpush.msra.mxu0 0.0
      %500 = vmatpush.msra.mxu0 0.0
      %501 = vmatpush.msra.mxu0 0.0
      %502 = vmatpush.msra.mxu0 0.0
      %503 = vmatpush.msra.mxu0 0.0
      %504 = vmatpush.msra.mxu0 0.0
      %505 = vmatpush.msra.mxu0 0.0
      %506 = vmatpush.msra.mxu0 0.0
      %507 = vmatpush.msra.mxu0 0.0
      %508 = vmatpush.msra.mxu0 0.0
      %509 = vmatpush.msra.mxu0 0.0
      %510 = vmatpush.msra.mxu0 0.0
      %511 = vmatpush.msra.mxu0 %v498
      %512 = vmatpush.msra.mxu0 %v497
      %513 = vmatpush.msra.mxu0 %v496
      %514 = vmatpush.msra.mxu0 %v495
      %515 = vmatmul.f32.gmra.mxu0 %v287
      %v516 = vpop.f32.mrf.mxu0
      %v517 = vadd.f32 0.0, %v516
      %518 = vmatmul.f32.gmra.mxu0 %v290
      %v519 = vpop.f32.mrf.mxu0
      %v520 = vadd.f32 0.0, %v519
      %521 = vmatmul.f32.gmra.mxu0 %v293
      %v522 = vpop.f32.mrf.mxu0
      %v523 = vadd.f32 0.0, %v522
      %524 = vmatmul.f32.gmra.mxu0 %v296
      %v525 = vpop.f32.mrf.mxu0
      %v526 = vadd.f32 0.0, %v525
      %527 = vmatmul.f32.gmra.mxu0 %v299
      %v528 = vpop.f32.mrf.mxu0
      %v529 = vadd.f32 0.0, %v528
      %530 = vmatmul.f32.gmra.mxu0 %v302
      %v531 = vpop.f32.mrf.mxu0
      %v532 = vadd.f32 0.0, %v531
      %533 = vmatmul.f32.gmra.mxu0 %v305
      %v534 = vpop.f32.mrf.mxu0
      %v535 = vadd.f32 0.0, %v534
      %536 = vmatmul.f32.gmra.mxu0 %v308
      %v537 = vpop.f32.mrf.mxu0
      %v538 = vadd.f32 0.0, %v537
      %539 = vmatmul.f32.gmra.mxu0 %v311
      %v540 = vpop.f32.mrf.mxu0
      %v541 = vadd.f32 0.0, %v540
      %542 = vmatmul.f32.gmra.mxu0 %v314
      %v543 = vpop.f32.mrf.mxu0
      %v544 = vadd.f32 0.0, %v543
      %545 = vmatmul.f32.gmra.mxu0 %v317
      %v546 = vpop.f32.mrf.mxu0
      %v547 = vadd.f32 0.0, %v546
      %548 = vmatmul.f32.gmra.mxu0 %v320
      %v549 = vpop.f32.mrf.mxu0
      %v550 = vadd.f32 0.0, %v549
      %551 = vmatmul.f32.gmra.mxu0 %v323
      %v552 = vpop.f32.mrf.mxu0
      %v553 = vadd.f32 0.0, %v552
      %554 = vmatmul.f32.gmra.mxu0 %v326
      %v555 = vpop.f32.mrf.mxu0
      %v556 = vadd.f32 0.0, %v555
      %557 = vmatmul.f32.gmra.mxu0 %v329
      %v558 = vpop.f32.mrf.mxu0
      %v559 = vadd.f32 0.0, %v558
      %560 = vmatmul.f32.gmra.mxu0 %v332
      %v561 = vpop.f32.mrf.mxu0
      %v562 = vadd.f32 0.0, %v561
      %563 = vmatmul.f32.gmra.mxu0 %v335
      %v564 = vpop.f32.mrf.mxu0
      %v565 = vadd.f32 0.0, %v564
      %566 = vmatmul.f32.gmra.mxu0 %v338
      %v567 = vpop.f32.mrf.mxu0
      %v568 = vadd.f32 0.0, %v567
      %569 = vmatmul.f32.gmra.mxu0 %v341
      %v570 = vpop.f32.mrf.mxu0
      %v571 = vadd.f32 0.0, %v570
      %572 = vmatmul.f32.gmra.mxu0 %v344
      %v573 = vpop.f32.mrf.mxu0
      %v574 = vadd.f32 0.0, %v573
      %575 = vmatmul.f32.gmra.mxu0 %v347
      %v576 = vpop.f32.mrf.mxu0
      %v577 = vadd.f32 0.0, %v576
      %578 = vmatmul.f32.gmra.mxu0 %v350
      %v579 = vpop.f32.mrf.mxu0
      %v580 = vadd.f32 0.0, %v579
      %581 = vmatmul.f32.gmra.mxu0 %v353
      %v582 = vpop.f32.mrf.mxu0
      %v583 = vadd.f32 0.0, %v582
      %584 = vmatmul.f32.gmra.mxu0 %v356
      %v585 = vpop.f32.mrf.mxu0
      %v586 = vadd.f32 0.0, %v585
      %587 = vmatmul.f32.gmra.mxu0 %v359
      %v588 = vpop.f32.mrf.mxu0
      %v589 = vadd.f32 0.0, %v588
      %590 = vmatmul.f32.gmra.mxu0 %v362
      %v591 = vpop.f32.mrf.mxu0
      %v592 = vadd.f32 0.0, %v591
      %593 = vmatmul.f32.gmra.mxu0 %v365
      %v594 = vpop.f32.mrf.mxu0
      %v595 = vadd.f32 0.0, %v594
      %596 = vmatmul.f32.gmra.mxu0 %v368
      %v597 = vpop.f32.mrf.mxu0
      %v598 = vadd.f32 0.0, %v597
      %599 = vmatmul.f32.gmra.mxu0 %v371
      %v600 = vpop.f32.mrf.mxu0
      %v601 = vadd.f32 0.0, %v600
      %602 = vmatmul.f32.gmra.mxu0 %v374
      %v603 = vpop.f32.mrf.mxu0
      %v604 = vadd.f32 0.0, %v603
      %605 = vmatmul.f32.gmra.mxu0 %v377
      %v606 = vpop.f32.mrf.mxu0
      %v607 = vadd.f32 0.0, %v606
      %608 = vmatmul.f32.gmra.mxu0 %v380
      %v609 = vpop.f32.mrf.mxu0
      %v610 = vadd.f32 0.0, %v609
      %611 = vdwg.mxu0
      %vm612 = vcmask 523264
      %613 = vst.msk [vmem:[%s239] sm:$0xff] %vm612, %v400
      %614 = vst.msk [vmem:[%s239 + $0x8] sm:$0xff] %vm612, %v403
      %615 = vst.msk [vmem:[%s239 + $0x10] sm:$0xff] %vm612, %v406
      %616 = vst.msk [vmem:[%s239 + $0x18] sm:$0xff] %vm612, %v409
      %617 = vst.msk [vmem:[%s239 + $0x20] sm:$0xff] %vm612, %v412
      %618 = vst.msk [vmem:[%s239 + $0x28] sm:$0xff] %vm612, %v415
      %619 = vst.msk [vmem:[%s239 + $0x30] sm:$0xff] %vm612, %v418
      %620 = vst.msk [vmem:[%s239 + $0x38] sm:$0xff] %vm612, %v421
      %621 = vst.msk [vmem:[%s239 + $0x40] sm:$0xff] %vm612, %v424
      %622 = vst.msk [vmem:[%s239 + $0x48] sm:$0xff] %vm612, %v427
      %623 = vst.msk [vmem:[%s239 + $0x50] sm:$0xff] %vm612, %v430
      %624 = vst.msk [vmem:[%s239 + $0x58] sm:$0xff] %vm612, %v433
      %625 = vst.msk [vmem:[%s239 + $0x60] sm:$0xff] %vm612, %v436
      %626 = vst.msk [vmem:[%s239 + $0x68] sm:$0xff] %vm612, %v439
      %627 = vst.msk [vmem:[%s239 + $0x70] sm:$0xff] %vm612, %v442
      %628 = vst.msk [vmem:[%s239 + $0x78] sm:$0xff] %vm612, %v445
      %629 = vst.msk [vmem:[%s239 + $0x80] sm:$0xff] %vm612, %v448
      %630 = vst.msk [vmem:[%s239 + $0x88] sm:$0xff] %vm612, %v451
      %631 = vst.msk [vmem:[%s239 + $0x90] sm:$0xff] %vm612, %v454
      %632 = vst.msk [vmem:[%s239 + $0x98] sm:$0xff] %vm612, %v457
      %633 = vst.msk [vmem:[%s239 + $0xa0] sm:$0xff] %vm612, %v460
      %634 = vst.msk [vmem:[%s239 + $0xa8] sm:$0xff] %vm612, %v463
      %635 = vst.msk [vmem:[%s239 + $0xb0] sm:$0xff] %vm612, %v466
      %636 = vst.msk [vmem:[%s239 + $0xb8] sm:$0xff] %vm612, %v469
      %637 = vst.msk [vmem:[%s239 + $0xc0] sm:$0xff] %vm612, %v472
      %638 = vst.msk [vmem:[%s239 + $0xc8] sm:$0xff] %vm612, %v475
      %639 = vst.msk [vmem:[%s239 + $0xd0] sm:$0xff] %vm612, %v478
      %640 = vst.msk [vmem:[%s239 + $0xd8] sm:$0xff] %vm612, %v481
      %641 = vst.msk [vmem:[%s239 + $0xe0] sm:$0xff] %vm612, %v484
      %642 = vst.msk [vmem:[%s239 + $0xe8] sm:$0xff] %vm612, %v487
      %643 = vst.msk [vmem:[%s239 + $0xf0] sm:$0xff] %vm612, %v490
      %644 = vst.msk [vmem:[%s239 + $0xf8] sm:$0xff] %vm612, %v493
      %v645 = vmul.f32 %v400, %v400
      %v646 = vmul.f32 %v403, %v403
      %v647 = vmul.f32 %v406, %v406
      %v648 = vmul.f32 %v409, %v409
      %v649 = vmul.f32 %v412, %v412
      %v650 = vmul.f32 %v415, %v415
      %v651 = vmul.f32 %v418, %v418
      %v652 = vmul.f32 %v421, %v421
      %v653 = vmul.f32 %v424, %v424
      %v654 = vmul.f32 %v427, %v427
      %v655 = vmul.f32 %v430, %v430
      %v656 = vmul.f32 %v433, %v433
      %v657 = vmul.f32 %v436, %v436
      %v658 = vmul.f32 %v439, %v439
      %v659 = vmul.f32 %v442, %v442
      %v660 = vmul.f32 %v445, %v445
      %v661 = vmul.f32 %v448, %v448
      %v662 = vmul.f32 %v451, %v451
      %v663 = vmul.f32 %v454, %v454
      %v664 = vmul.f32 %v457, %v457
      %v665 = vmul.f32 %v460, %v460
      %v666 = vmul.f32 %v463, %v463
      %v667 = vmul.f32 %v466, %v466
      %v668 = vmul.f32 %v469, %v469
      %v669 = vmul.f32 %v472, %v472
      %v670 = vmul.f32 %v475, %v475
      %v671 = vmul.f32 %v478, %v478
      %v672 = vmul.f32 %v481, %v481
      %v673 = vmul.f32 %v484, %v484
      %v674 = vmul.f32 %v487, %v487
      %v675 = vmul.f32 %v490, %v490
      %v676 = vmul.f32 %v493, %v493
      %v677 = vsel %vm612, %v645, 0.0
      %v678 = vsel %vm612, %v646, 0.0
      %v679 = vadd.f32 %v677, %v678
      %v680 = vsel %vm612, %v647, 0.0
      %v681 = vadd.f32 %v679, %v680
      %v682 = vsel %vm612, %v648, 0.0
      %v683 = vadd.f32 %v681, %v682
      %v684 = vsel %vm612, %v649, 0.0
      %v685 = vadd.f32 %v683, %v684
      %v686 = vsel %vm612, %v650, 0.0
      %v687 = vadd.f32 %v685, %v686
      %v688 = vsel %vm612, %v651, 0.0
      %v689 = vadd.f32 %v687, %v688
      %v690 = vsel %vm612, %v652, 0.0
      %v691 = vadd.f32 %v689, %v690
      %v692 = vsel %vm612, %v653, 0.0
      %v693 = vadd.f32 %v691, %v692
      %v694 = vsel %vm612, %v654, 0.0
      %v695 = vadd.f32 %v693, %v694
      %v696 = vsel %vm612, %v655, 0.0
      %v697 = vadd.f32 %v695, %v696
      %v698 = vsel %vm612, %v656, 0.0
      %v699 = vadd.f32 %v697, %v698
      %v700 = vsel %vm612, %v657, 0.0
      %v701 = vadd.f32 %v699, %v700
      %v702 = vsel %vm612, %v658, 0.0
      %v703 = vadd.f32 %v701, %v702
      %v704 = vsel %vm612, %v659, 0.0
      %v705 = vadd.f32 %v703, %v704
      %v706 = vsel %vm612, %v660, 0.0
      %v707 = vadd.f32 %v705, %v706
      %v708 = vsel %vm612, %v661, 0.0
      %v709 = vadd.f32 %v707, %v708
      %v710 = vsel %vm612, %v662, 0.0
      %v711 = vadd.f32 %v709, %v710
      %v712 = vsel %vm612, %v663, 0.0
      %v713 = vadd.f32 %v711, %v712
      %v714 = vsel %vm612, %v664, 0.0
      %v715 = vadd.f32 %v713, %v714
      %v716 = vsel %vm612, %v665, 0.0
      %v717 = vadd.f32 %v715, %v716
      %v718 = vsel %vm612, %v666, 0.0
      %v719 = vadd.f32 %v717, %v718
      %v720 = vsel %vm612, %v667, 0.0
      %v721 = vadd.f32 %v719, %v720
      %v722 = vsel %vm612, %v668, 0.0
      %v723 = vadd.f32 %v721, %v722
      %v724 = vsel %vm612, %v669, 0.0
      %v725 = vadd.f32 %v723, %v724
      %v726 = vsel %vm612, %v670, 0.0
      %v727 = vadd.f32 %v725, %v726
      %v728 = vsel %vm612, %v671, 0.0
      %v729 = vadd.f32 %v727, %v728
      %v730 = vsel %vm612, %v672, 0.0
      %v731 = vadd.f32 %v729, %v730
      %v732 = vsel %vm612, %v673, 0.0
      %v733 = vadd.f32 %v731, %v732
      %v734 = vsel %vm612, %v674, 0.0
      %v735 = vadd.f32 %v733, %v734
      %v736 = vsel %vm612, %v675, 0.0
      %v737 = vadd.f32 %v735, %v736
      %v738 = vsel %vm612, %v676, 0.0
      %v739 = vadd.f32 %v737, %v738
      %740 = vadd.xlane.f32.xlu0 %v739
      %v741 = vpop.xlane.xlu0 %740
      %v742 = vrot.slane %v741, 4
      %v743 = vadd.f32 %v741, %v742
      %v744 = vrot.slane %v743, 2
      %v745 = vadd.f32 %v743, %v744
      %v746 = vrot.slane %v745, 1
      %v747 = vadd.f32 %v745, %v746
      %s748 = vtos %v747
      %v749 = vmul.f32 %v517, %v249
      %v750 = vmul.f32 %v520, %v250
      %v751 = vmul.f32 %v523, %v251
      %v752 = vmul.f32 %v526, %v252
      %v753 = vmul.f32 %v529, %v253
      %v754 = vmul.f32 %v532, %v254
      %v755 = vmul.f32 %v535, %v255
      %v756 = vmul.f32 %v538, %v256
      %v757 = vmul.f32 %v541, %v257
      %v758 = vmul.f32 %v544, %v258
      %v759 = vmul.f32 %v547, %v259
      %v760 = vmul.f32 %v550, %v260
      %v761 = vmul.f32 %v553, %v261
      %v762 = vmul.f32 %v556, %v262
      %v763 = vmul.f32 %v559, %v263
      %v764 = vmul.f32 %v562, %v264
      %v765 = vmul.f32 %v565, %v265
      %v766 = vmul.f32 %v568, %v266
      %v767 = vmul.f32 %v571, %v267
      %v768 = vmul.f32 %v574, %v268
      %v769 = vmul.f32 %v577, %v269
      %v770 = vmul.f32 %v580, %v270
      %v771 = vmul.f32 %v583, %v271
      %v772 = vmul.f32 %v586, %v272
      %v773 = vmul.f32 %v589, %v273
      %v774 = vmul.f32 %v592, %v274
      %v775 = vmul.f32 %v595, %v275
      %v776 = vmul.f32 %v598, %v276
      %v777 = vmul.f32 %v601, %v277
      %v778 = vmul.f32 %v604, %v278
      %v779 = vmul.f32 %v607, %v279
      %v780 = vmul.f32 %v610, %v280
      %v781 = vsel %vm285, %v749, 0.0
      %v782 = vsel %vm285, %v750, 0.0
      %v783 = vadd.f32 %v781, %v782
      %v784 = vsel %vm285, %v751, 0.0
      %v785 = vadd.f32 %v783, %v784
      %v786 = vsel %vm285, %v752, 0.0
      %v787 = vadd.f32 %v785, %v786
      %v788 = vsel %vm285, %v753, 0.0
      %v789 = vadd.f32 %v787, %v788
      %v790 = vsel %vm285, %v754, 0.0
      %v791 = vadd.f32 %v789, %v790
      %v792 = vsel %vm285, %v755, 0.0
      %v793 = vadd.f32 %v791, %v792
      %v794 = vsel %vm285, %v756, 0.0
      %v795 = vadd.f32 %v793, %v794
      %v796 = vsel %vm285, %v757, 0.0
      %v797 = vadd.f32 %v795, %v796
      %v798 = vsel %vm285, %v758, 0.0
      %v799 = vadd.f32 %v797, %v798
      %v800 = vsel %vm285, %v759, 0.0
      %v801 = vadd.f32 %v799, %v800
      %v802 = vsel %vm285, %v760, 0.0
      %v803 = vadd.f32 %v801, %v802
      %v804 = vsel %vm285, %v761, 0.0
      %v805 = vadd.f32 %v803, %v804
      %v806 = vsel %vm285, %v762, 0.0
      %v807 = vadd.f32 %v805, %v806
      %v808 = vsel %vm285, %v763, 0.0
      %v809 = vadd.f32 %v807, %v808
      %v810 = vsel %vm285, %v764, 0.0
      %v811 = vadd.f32 %v809, %v810
      %v812 = vsel %vm285, %v765, 0.0
      %v813 = vadd.f32 %v811, %v812
      %v814 = vsel %vm285, %v766, 0.0
      %v815 = vadd.f32 %v813, %v814
      %v816 = vsel %vm285, %v767, 0.0
      %v817 = vadd.f32 %v815, %v816
      %v818 = vsel %vm285, %v768, 0.0
      %v819 = vadd.f32 %v817, %v818
      %v820 = vsel %vm285, %v769, 0.0
      %v821 = vadd.f32 %v819, %v820
      %v822 = vsel %vm285, %v770, 0.0
      %v823 = vadd.f32 %v821, %v822
      %v824 = vsel %vm285, %v771, 0.0
      %v825 = vadd.f32 %v823, %v824
      %v826 = vsel %vm285, %v772, 0.0
      %v827 = vadd.f32 %v825, %v826
      %v828 = vsel %vm285, %v773, 0.0
      %v829 = vadd.f32 %v827, %v828
      %v830 = vsel %vm285, %v774, 0.0
      %v831 = vadd.f32 %v829, %v830
      %v832 = vsel %vm285, %v775, 0.0
      %v833 = vadd.f32 %v831, %v832
      %v834 = vsel %vm285, %v776, 0.0
      %v835 = vadd.f32 %v833, %v834
      %v836 = vsel %vm285, %v777, 0.0
      %v837 = vadd.f32 %v835, %v836
      %v838 = vsel %vm285, %v778, 0.0
      %v839 = vadd.f32 %v837, %v838
      %v840 = vsel %vm285, %v779, 0.0
      %v841 = vadd.f32 %v839, %v840
      %v842 = vsel %vm285, %v780, 0.0
      %v843 = vadd.f32 %v841, %v842
      %844 = vadd.xlane.f32.xlu0 %v843
      %v845 = vpop.xlane.xlu0 %844
      %v846 = vrot.slane %v845, 4
      %v847 = vadd.f32 %v845, %v846
      %v848 = vrot.slane %v847, 2
      %v849 = vadd.f32 %v847, %v848
      %v850 = vrot.slane %v849, 1
      %v851 = vadd.f32 %v849, %v850
      %s852 = vtos %v851
      %v853 = vstv %s748
      %854 = vst [vmem:[%s244] sm:$0xff] %v853
      %v855 = vstv %s852
      %856 = vst [vmem:[%s248] sm:$0xff] %v855
      %s857 = smul.u32 32, %s17
      %p858 = scmp.lt.s32.totalorder %s857, 95
      %s859 = scalar_select %p858, %s857, 95
      %s860 = smul.addr %s859, 8
      %s861 = scalar_lea.vmem %s3, %s860
      %p862 = scmp.lt.s32.totalorder %s17, 2
      %s863 = scalar_select %p862, %s17, 2
      %s864 = smul.addr %s863, 8
      %s865 = scalar_lea.vmem %s4, %s864
      %p866 = scmp.lt.s32.totalorder %s17, 2
      %s867 = scalar_select %p866, %s17, 2
      %s868 = smul.addr %s867, 8
      %s869 = scalar_lea.vmem %s5, %s868
      // Predicated region
      $region33: #{_linear_appr_pallas.1} parent=31 // pred_check
        %p870 = pneg %p103
      $region34: #{_linear_appr_pallas.1} parent=31 // pred_check_branch
        %872 = sbr.rel (%p870) target = $region36
      $region35: #{_linear_appr_pallas.1} parent=31 // pred_region
        %s873 = smul.u32 32, %s17
      $region36: #{_linear_appr_pallas.1} parent=31 // pred_fallthru
        _
      // Predicated region
      $region37: #{_linear_appr_pallas.1} parent=31 // pred_check
        %p874 = pneg %p129
      $region38: #{_linear_appr_pallas.1} parent=31 // pred_check_branch
        %876 = sbr.rel (%p874) target = $region40
      $region39: #{_linear_appr_pallas.1} parent=31 // pred_region
        _
      $region40: #{_linear_appr_pallas.1} parent=31 // pred_fallthru
        _
      // Predicated region
      $region41: #{_linear_appr_pallas.1} parent=31 // pred_check
        %p877 = pneg %p155
      $region42: #{_linear_appr_pallas.1} parent=31 // pred_check_branch
        %879 = sbr.rel (%p877) target = $region44
      $region43: #{_linear_appr_pallas.1} parent=31 // pred_region
        _
      $region44: #{_linear_appr_pallas.1} parent=31 // pred_fallthru
        _
    $region32: #{_linear_appr_pallas.1} parent=5 // pred_fallthru
      _
    %p880 = scmp.le.s32.totalorder 2, %s12
    // Predicated region
    $region45: #{_linear_appr_pallas.1} parent=5 // pred_check
      %p881 = pneg %p880
    $region46: #{_linear_appr_pallas.1} parent=5 // pred_check_branch
      %883 = sbr.rel (%p881) target = $region48
    $region47: #{_linear_appr_pallas.1} parent=5 // pred_region
      %s884 = ssub.s32 %s12, 2
      // Predicated region
      $region49: #{_linear_appr_pallas.1} parent=47 // pred_check
        %p885 = pneg %p109
      $region50: #{_linear_appr_pallas.1} parent=47 // pred_check_branch
        %887 = sbr.rel (%p885) target = $region52
      $region51: #{_linear_appr_pallas.1} parent=47 // pred_region
        %s888 = smul.u32 32, %s18
        %p889 = scmp.lt.s32.totalorder %s888, 95
        %s890 = scalar_select %p889, %s888, 95
        %s891 = smul.addr %s890, 8
        %s892 = scalar_lea.vmem %s3, %s891
      $region52: #{_linear_appr_pallas.1} parent=47 // pred_fallthru
        _
      // Predicated region
      $region53: #{_linear_appr_pallas.1} parent=47 // pred_check
        %p893 = pneg %p135
      $region54: #{_linear_appr_pallas.1} parent=47 // pred_check_branch
        %895 = sbr.rel (%p893) target = $region56
      $region55: #{_linear_appr_pallas.1} parent=47 // pred_region
        %p896 = scmp.lt.s32.totalorder %s18, 2
        %s897 = scalar_select %p896, %s18, 2
        %s898 = smul.addr %s897, 8
        %s899 = scalar_lea.vmem %s4, %s898
      $region56: #{_linear_appr_pallas.1} parent=47 // pred_fallthru
        _
      // Predicated region
      $region57: #{_linear_appr_pallas.1} parent=47 // pred_check
        %p900 = pneg %p161
      $region58: #{_linear_appr_pallas.1} parent=47 // pred_check_branch
        %902 = sbr.rel (%p900) target = $region60
      $region59: #{_linear_appr_pallas.1} parent=47 // pred_region
        %p903 = scmp.lt.s32.totalorder %s18, 2
        %s904 = scalar_select %p903, %s18, 2
        %s905 = smul.addr %s904, 8
        %s906 = scalar_lea.vmem %s5, %s905
      $region60: #{_linear_appr_pallas.1} parent=47 // pred_fallthru
        _
    $region48: #{_linear_appr_pallas.1} parent=5 // pred_fallthru
      _
  $region6: #{_linear_appr_pallas.1} parent=0 // loop_footer
    %s16 = sadd.s32 1, %s12
  $region7: #{_linear_appr_pallas.1} parent=0 // loop_footer_branch
    %11 = sbr.rel target = $region3
  $region8: #{_linear_appr_pallas.1} parent=0 // loop_exit
    _

</llo_original>
